<compile_context>
chip_gen: v6e
topology: v6e:2x2x1
jax: 0.10.0
libtpu: 0.0.40
codegen_flags: <defaults>
</compile_context>

<pallas_src>
import math
import functools

import jax
import jax.numpy as jnp
from jax import lax
from jax.experimental import pallas as pl
from jax.experimental.pallas import tpu as pltpu

_LN_EPS = 1e-5  # torch.nn.LayerNorm default eps


def _layernorm(x, g, b):
    mu = jnp.mean(x, axis=-1, keepdims=True)
    xc = x - mu
    var = jnp.mean(xc * xc, axis=-1, keepdims=True)
    return xc * lax.rsqrt(var + _LN_EPS) * g + b


def _gelu(x):
    # torch.nn.GELU() default = exact erf GELU
    return 0.5 * x * (1.0 + lax.erf(x * 0.7071067811865476))


# --------------------------- tiled linear kernel -----------------------------
def _linear_kernel(x_ref, w_ref, b_ref, o_ref):
    o_ref[...] = (
        jnp.dot(x_ref[...].astype(jnp.bfloat16), w_ref[...],
                preferred_element_type=jnp.float32)
        + b_ref[...]
    ).astype(o_ref.dtype)


def pallas_linear(x2d, w, b, *, block_rows=512):
    """(M, K) @ (K, N) + (N,); rows tiled over a parallel grid, bf16 matmul."""
    M, K = x2d.shape
    N = w.shape[1]
    bm = min(block_rows, M)
    Mp = pl.cdiv(M, bm) * bm
    if Mp != M:
        x2d = jnp.pad(x2d, ((0, Mp - M), (0, 0)))
    out = pl.pallas_call(
        _linear_kernel,
        out_shape=jax.ShapeDtypeStruct((Mp, N), jnp.float32),
        grid=(Mp // bm,),
        in_specs=[
            pl.BlockSpec((bm, K), lambda i: (i, 0)),
            pl.BlockSpec((K, N), lambda i: (0, 0)),
            pl.BlockSpec((1, N), lambda i: (0, 0)),
        ],
        out_specs=pl.BlockSpec((bm, N), lambda i: (i, 0)),
        compiler_params=pltpu.CompilerParams(dimension_semantics=("parallel",)),
    )(x2d, w, b.reshape(1, N))
    return out[:M]


# ----------------------- fused transformer-layer kernel ----------------------
def _vit_layer_kernel(x_ref, wqkv_ref, bqkv_ref, wo_ref, bo_ref,
                      ln1g_ref, ln1b_ref, w1_ref, b1_ref, w2_ref, b2_ref,
                      ln2g_ref, ln2b_ref, o_ref, *, num_head, s_true):
    bt, S, D = x_ref.shape
    dh = D // num_head
    scale = 1.0 / math.sqrt(dh)

    x = x_ref[...].astype(jnp.float32).reshape(bt * S, D)        # tokens x D

    # ---- fused QKV projection: one full-width MXU matmul (bf16 in, f32 acc) -
    qkv = jnp.dot(x.astype(jnp.bfloat16), wqkv_ref[...],
                  preferred_element_type=jnp.float32) + bqkv_ref[...]

    # key-padding mask (token columns >= s_true are padding rows)
    if s_true < S:
        kmask = lax.broadcasted_iota(jnp.int32, (1, 1, S), 2) < s_true

    # ---- attention: per-head small GEMMs, batched over the bt batch rows ----
    # NOTE: for real ViT head counts (12+) this static unroll should become a
    # head-batched einsum / fori_loop; with QKV + output projections fused the
    # per-head remainder is only the two small (S,S) GEMMs.
    head_outs = []
    for h in range(num_head):
        qh = qkv[:, h * dh:(h + 1) * dh].reshape(bt, S, dh)
        kh = qkv[:, D + h * dh:D + (h + 1) * dh].reshape(bt, S, dh)
        vh = qkv[:, 2 * D + h * dh:2 * D + (h + 1) * dh].reshape(bt, S, dh)
        s = jnp.einsum("bqd,bkd->bqk", qh.astype(jnp.bfloat16),
                       kh.astype(jnp.bfloat16),
                       preferred_element_type=jnp.float32) * scale
        if s_true < S:
            s = jnp.where(kmask, s, -1e30)
        s = s - jnp.max(s, axis=-1, keepdims=True)
        p = jnp.exp(s)
        # divide on the (idle) EUP slot instead of the VALU
        p = p * pl.reciprocal(jnp.sum(p, axis=-1, keepdims=True), approx=True)
        ah = jnp.einsum("bqk,bkd->bqd", p.astype(jnp.bfloat16),
                        vh.astype(jnp.bfloat16),
                        preferred_element_type=jnp.float32)
        head_outs.append(ah.reshape(bt * S, dh))

    # ---- fused output projection on the concatenated heads ------------------
    a = jnp.concatenate(head_outs, axis=-1)                      # (bt*S, D)
    attn = jnp.dot(a.astype(jnp.bfloat16), wo_ref[...],
                   preferred_element_type=jnp.float32) + bo_ref[...]

    x = x + attn                                                  # residual 1

    # ---- MLP branch: LN -> Linear -> GELU -> Linear (bf16 matmuls) ----------
    h1 = _layernorm(x, ln1g_ref[...], ln1b_ref[...])
    h1 = jnp.dot(h1.astype(jnp.bfloat16), w1_ref[...],
                 preferred_element_type=jnp.float32) + b1_ref[...]
    h1 = _gelu(h1)
    h1 = jnp.dot(h1.astype(jnp.bfloat16), w2_ref[...],
                 preferred_element_type=jnp.float32) + b2_ref[...]
    x = x + h1                                                    # residual 2

    # ---- post layernorm ------------------------------------------------------
    x = _layernorm(x, ln2g_ref[...], ln2b_ref[...])
    o_ref[...] = x.reshape(bt, S, D).astype(o_ref.dtype)


def _pick_batch_block(B, target=8):
    """Largest divisor of B <= target that keeps >=2 grid steps (v7x has 2 TCs)."""
    best = 1
    for bt in range(1, min(target, B) + 1):
        if B % bt == 0 and (B // bt >= 2 or B == 1):
            best = bt
    return best


def vit_layer(x, lp, *, num_head, s_true):
    B, S, D = x.shape
    M = lp["w1"].shape[1]
    bt = _pick_batch_block(B)

    def wspec(shp):
        return pl.BlockSpec(shp, lambda b: (0, 0))   # grid-invariant weights

    flops = 2 * B * S * D * (3 * D + D + 2 * M) + 4 * B * S * S * D
    transc = B * S * (S * num_head + M)
    bytes_acc = (2 * B * S * D * 4                       # x in + out (f32)
                 + (4 * D * D + 2 * D * M) * 2           # bf16 weights
                 + (6 * D + M + 4 * D) * 4)              # biases / LN params

    kernel = functools.partial(_vit_layer_kernel, num_head=num_head,
                               s_true=s_true)
    return pl.pallas_call(
        kernel,
        out_shape=jax.ShapeDtypeStruct((B, S, D), x.dtype),
        grid=(B // bt,),
        in_specs=[
            pl.BlockSpec((bt, S, D), lambda b: (b, 0, 0)),         # x
            wspec((D, 3 * D)), wspec((1, 3 * D)),                  # wqkv, bqkv
            wspec((D, D)), wspec((1, D)),                          # wo, bo
            wspec((1, D)), wspec((1, D)),                          # ln1 g, b
            wspec((D, M)), wspec((1, M)),                          # w1, b1
            wspec((M, D)), wspec((1, D)),                          # w2, b2
            wspec((1, D)), wspec((1, D)),                          # ln2 g, b
        ],
        out_specs=pl.BlockSpec((bt, S, D), lambda b: (b, 0, 0)),
        compiler_params=pltpu.CompilerParams(dimension_semantics=("parallel",)),
        cost_estimate=pl.CostEstimate(flops=flops, transcendentals=transc,
                                      bytes_accessed=bytes_acc),
    )(x, lp["wqkv"], lp["bqkv"], lp["wo"], lp["bo"],
      lp["ln1g"], lp["ln1b"], lp["w1"], lp["b1"], lp["w2"], lp["b2"],
      lp["ln2g"], lp["ln2b"])


# --------------------------------- glue --------------------------------------
def extract_patches(x_img, p):
    """NCHW image -> (B, N, C*p*p) patch rows (== Conv2d stride=p, kernel=p)."""
    B, C, H, W = x_img.shape
    Hp, Wp = H // p, W // p
    xp = x_img.reshape(B, C, Hp, p, Wp, p)
    xp = xp.transpose(0, 2, 4, 1, 3, 5)                    # B, Hp, Wp, C, p, p
    return xp.reshape(B, Hp * Wp, C * p * p)


def init_params(key, C, patch, D, M, num_layers, num_head, num_class, N):
    s = 0.02

    def nrm(k, shp, dtype=jnp.float32):
        return (jax.random.normal(k, shp, jnp.float32) * s).astype(dtype)

    bf16 = jnp.bfloat16
    ks = jax.random.split(key, 8 + num_layers)
    params = {
        "w_patch": nrm(ks[0], (C * patch * patch, D), bf16),
        "b_patch": nrm(ks[1], (D,)),
        "cls": nrm(ks[2], (1, 1, D)),
        "pos": nrm(ks[3], (1, N + 1, D)),
        "w_head": nrm(ks[4], (D, num_class), bf16),
        "b_head": nrm(ks[5], (num_class,)),
    }
    layers = []
    for i in range(num_layers):
        lk = jax.random.split(ks[8 + i], 12)
        wq, wk, wv = (nrm(lk[0], (D, D), bf16), nrm(lk[2], (D, D), bf16),
                      nrm(lk[4], (D, D), bf16))
        layers.append(dict(
            wqkv=jnp.concatenate([wq, wk, wv], axis=1),            # (D, 3D) bf16
            bqkv=jnp.concatenate([nrm(lk[1], (1, D)), nrm(lk[3], (1, D)),
                                  nrm(lk[5], (1, D))], axis=1),    # (1, 3D) f32
            wo=nrm(lk[6], (D, D), bf16), bo=nrm(lk[7], (1, D)),
            ln1g=jnp.ones((1, D), jnp.float32), ln1b=jnp.zeros((1, D), jnp.float32),
            w1=nrm(lk[8], (D, M), bf16), b1=nrm(lk[9], (1, M)),
            w2=nrm(lk[10], (M, D), bf16), b2=nrm(lk[11], (1, D)),
            ln2g=jnp.ones((1, D), jnp.float32), ln2b=jnp.zeros((1, D), jnp.float32),
        ))
    params["layers"] = layers
    return params


def vit_forward_pallas(x_img, params, *, patch, num_head):
    B, C, H, W = x_img.shape
    D = params["w_patch"].shape[1]
    N = (H // patch) * (W // patch)
    s_true = N + 1
    s_pad = ((s_true + 7) // 8) * 8                        # sublane-align tokens
    patches = extract_patches(x_img, patch)                # glue (layout only)
    pe = pallas_linear(patches.reshape(B * N, -1),
                       params["w_patch"], params["b_patch"]).reshape(B, N, D)
    cls = jnp.broadcast_to(params["cls"], (B, 1, D))
    # glue: CLS-token concat + positional-embedding add (pure elementwise)
    x = jnp.concatenate([cls, pe], axis=1) + params["pos"]
    if s_pad != s_true:
        x = jnp.pad(x, ((0, 0), (0, s_pad - s_true), (0, 0)))
    for lp in params["layers"]:
        x = vit_layer(x, lp, num_head=num_head, s_true=s_true)
    return pallas_linear(x[:, 0, :], params["w_head"], params["b_head"])


# ------------------------ pure-JAX reference forward -------------------------
def vit_forward_ref(x_img, params, *, patch, num_head):
    f32 = lambda a: a.astype(jnp.float32)
    B, C, H, W = x_img.shape
    D = params["w_patch"].shape[1]
    patches = extract_patches(x_img, patch)
    pe = patches @ f32(params["w_patch"]) + params["b_patch"]
    cls = jnp.broadcast_to(params["cls"], (B, 1, D))
    x = jnp.concatenate([cls, pe], axis=1) + params["pos"]
    S = x.shape[1]
    dh = D // num_head
    for lp in params["layers"]:
        qkv = x @ f32(lp["wqkv"]) + lp["bqkv"][0]
        q, k, v = qkv[..., :D], qkv[..., D:2 * D], qkv[..., 2 * D:]
        q = q.reshape(B, S, num_head, dh).transpose(0, 2, 1, 3)
        k = k.reshape(B, S, num_head, dh).transpose(0, 2, 1, 3)
        v = v.reshape(B, S, num_head, dh).transpose(0, 2, 1, 3)
        s = jnp.einsum("bhqd,bhkd->bhqk", q, k) / math.sqrt(dh)
        p = jax.nn.softmax(s, axis=-1)
        a = jnp.einsum("bhqk,bhkd->bhqd", p, v).transpose(0, 2, 1, 3).reshape(B, S, D)
        x = x + (a @ f32(lp["wo"]) + lp["bo"][0])
        h1 = _layernorm(x, lp["ln1g"][0], lp["ln1b"][0])
        h1 = _gelu(h1 @ f32(lp["w1"]) + lp["b1"][0])
        h1 = h1 @ f32(lp["w2"]) + lp["b2"][0]
        x = x + h1
        x = _layernorm(x, lp["ln2g"][0], lp["ln2b"][0])
    return x[:, 0, :] @ f32(params["w_head"]) + params["b_head"]


if __name__ == "__main__":
    # Small config consistent with the module: H=W=32, patch=16 -> N=4 (+CLS=5,
    # padded to 8 tokens); D=128 keeps the embedding lane-aligned.
    B, C, H, W = 2, 3, 32, 32
    patch, D, M, num_head, num_layers, num_class = 16, 128, 256, 4, 2, 2
    N = (H // patch) * (W // patch)

    key = jax.random.PRNGKey(0)
    kx, kp = jax.random.split(key)
    x_img = jax.random.normal(kx, (B, C, H, W), jnp.float32)
    params = init_params(kp, C, patch, D, M, num_layers, num_head, num_class, N)

    out = vit_forward_pallas(x_img, params, patch=patch, num_head=num_head)
    out = jax.block_until_ready(out)

    ref = vit_forward_ref(x_img, params, patch=patch, num_head=num_head)
    assert out.shape == (B, num_class), out.shape
    # bf16 matmul operands (f32 accumulation) vs. f32 reference -> loose tol.
    assert jnp.allclose(out, ref, atol=3e-2, rtol=3e-2), (out, ref)
    print("KERNEL_OK")
</pallas_src>

<mosaic_0001>
module attributes {stable_mosaic.version = 11 : i64} {
  func.func @_linear_kernel(%arg0: i32, %arg1: memref<8x768xf32, #tpu.memory_space<vmem>>, %arg2: memref<768x128xbf16, #tpu.memory_space<vmem>>, %arg3: memref<1x128xf32, #tpu.memory_space<vmem>>, %arg4: memref<8x128xf32, #tpu.memory_space<vmem>>) attributes {dimension_semantics = [#tpu.dimension_semantics<parallel>], iteration_bounds = array<i64: 1>, scalar_prefetch = 0 : i64, scratch_operands = 0 : i64, tpu.core_type = #tpu.core_type<tc>, window_params = [{transform_indices = @transform_0, window_bounds = array<i64: 8, 768>}, {pipeline_mode = #tpu.pipeline_mode<synchronous>, transform_indices = @transform_1, window_bounds = array<i64: 768, 128>}, {pipeline_mode = #tpu.pipeline_mode<synchronous>, transform_indices = @transform_2, window_bounds = array<i64: 1, 128>}, {transform_indices = @transform_3, window_bounds = array<i64: 8, 128>}]} {
    %c0 = arith.constant 0 : index
    %c0_0 = arith.constant 0 : index
    %0 = vector.load %arg1[%c0, %c0_0] : memref<8x768xf32, #tpu.memory_space<vmem>>, vector<8x768xf32>
    %1 = arith.truncf %0 : vector<8x768xf32> to vector<8x768xbf16>
    %c0_1 = arith.constant 0 : index
    %c0_2 = arith.constant 0 : index
    %2 = vector.load %arg2[%c0_1, %c0_2] : memref<768x128xbf16, #tpu.memory_space<vmem>>, vector<768x128xbf16>
    %cst = arith.constant dense<0.000000e+00> : vector<8x128xf32>
    %3 = tpu.matmul %1, %2, %cst {dimension_numbers = #tpu.dot_dimension_numbers<[1], [0], [0], [1], [0, 0, 1, 1], [], []>} : vector<8x768xbf16>, vector<768x128xbf16>, vector<8x128xf32> -> vector<8x128xf32>
    %c0_3 = arith.constant 0 : index
    %c0_4 = arith.constant 0 : index
    %4 = vector.load %arg3[%c0_3, %c0_4] : memref<1x128xf32, #tpu.memory_space<vmem>>, vector<1x128xf32>
    %5 = vector.broadcast %4 : vector<1x128xf32> to vector<8x128xf32>
    %6 = arith.addf %3, %5 : vector<8x128xf32>
    %c0_5 = arith.constant 0 : index
    %c0_6 = arith.constant 0 : index
    %7 = vector.load %arg4[%c0_5, %c0_6] : memref<8x128xf32, #tpu.memory_space<vmem>>, vector<8x128xf32>
    tpu.vector_store %arg4[%c0_5, %c0_6], %6 {strides = array<i32>} : memref<8x128xf32, #tpu.memory_space<vmem>>, vector<8x128xf32>,
    return
  }
  func.func @transform_0(%arg0: i32) -> (i32, i32) {
    %c0_i32 = arith.constant 0 : i32
    %c0_i32_0 = arith.constant 0 : i32
    return %arg0, %c0_i32 : i32, i32
  }
  func.func @transform_1(%arg0: i32) -> (i32, i32) {
    %c0_i32 = arith.constant 0 : i32
    %c0_i32_0 = arith.constant 0 : i32
    %c0_i32_1 = arith.constant 0 : i32
    return %c0_i32, %c0_i32_0 : i32, i32
  }
  func.func @transform_2(%arg0: i32) -> (i32, i32) {
    %c0_i32 = arith.constant 0 : i32
    %c0_i32_0 = arith.constant 0 : i32
    %c0_i32_1 = arith.constant 0 : i32
    return %c0_i32, %c0_i32_0 : i32, i32
  }
  func.func @transform_3(%arg0: i32) -> (i32, i32) {
    %c0_i32 = arith.constant 0 : i32
    %c0_i32_0 = arith.constant 0 : i32
    return %arg0, %c0_i32 : i32, i32
  }
}

</mosaic_0001>

<llo_original>
// kernel: tpu_custom_call.1
$region0: #{tpu_custom_call.1}
  #allocation0 [shape = 'u32[]', space=smem, size = 0x4, offset = 0x4, fixed_abs, tag = 'smem constant byte address 0x4 - core index']
  #allocation1 [shape = 'u32[144,128]{1,0:T(1,128)}', space=vmem, size = 0x12000, scoped, tag = 'internal scratch']
  %s0 = inlined_call_operand.hbm [shape: f32[8,768], index: 0, kind: input, shape index: {}]
  %s1 = inlined_call_operand.hbm [shape: bf16[768,128], index: 1, kind: input, shape index: {}]
  %s2 = inlined_call_operand.vmem [shape: f32[1,128], index: 2, kind: input, shape index: {}]
  %s3 = inlined_call_operand.hbm [shape: f32[8,128], index: 3, kind: output, shape index: {}]
  %s4 = sld [smem:[#allocation0]]
  $region30: #{tpu_custom_call.1} parent=0
    _
  %s6 = ssub.s32 1, %s4
  %s7 = scalar_select 0, %s6, %s4
  $region1: #{tpu_custom_call.1} parent=0
    #allocation2 [shape = 'u8[24576]{0}', space=vmem, size = 0x6000, scoped, tag = 'input window, operand 0, single buffered']
    #allocation3 [shape = 's32[1]{0}', space=sflag, size = 0x4, scoped, tag = 'scoped memory for tpu_custom_call.1']
    #allocation4 [shape = 's32[1]{0}', space=sflag, size = 0x4, scoped, tag = 'scoped memory for tpu_custom_call.1']
    #allocation5 [shape = 'u8[196608]{0}', space=vmem, size = 0x30000, scoped, tag = 'input window, operand 1, single buffered']
    #allocation6 [shape = 's32[1]{0}', space=sflag, size = 0x4, scoped, tag = 'scoped memory for tpu_custom_call.1']
    #allocation7 [shape = 'u8[4096]{0}', space=vmem, size = 0x1000, scoped, tag = 'output window, operand 0, single buffered']
    %8 = vsyncpa [#allocation3], 0
    %9 = vsyncpa [#allocation6], 0
    %10 = vsyncpa [#allocation4], 0
    // Predicated region
    $region2: #{tpu_custom_call.1} parent=1 // pred_check
      _
    $region3: #{tpu_custom_call.1} parent=1 // pred_check_branch
      %12 = sbr.rel (0) target = $region5
    $region4: #{tpu_custom_call.1} parent=1 // pred_region
      %s14 = ssub.s32 768, 768
      %15 = vsyncadd [#allocation3], %s14
      %s17 = sshll.u32 [#allocation2], 4
      %s18 = int_to_ptr.vmem [resolvable:$true] %s17
      %20 = dma.hbm_to_vmem [thread:$0]  %s0, 768, %s18, [#allocation3]
    $region5: #{tpu_custom_call.1} parent=1 // pred_fallthru
      _
    // Predicated region
    $region6: #{tpu_custom_call.1} parent=1 // pred_check
      _
    $region7: #{tpu_custom_call.1} parent=1 // pred_check_branch
      %22 = sbr.rel (0) target = $region9
    $region8: #{tpu_custom_call.1} parent=1 // pred_region
      %s24 = ssub.s32 6144, 6144
      %25 = vsyncadd [#allocation6], %s24
      %s26 = sshll.u32 [#allocation5], 4
      %s27 = int_to_ptr.vmem [resolvable:$true] %s26
      %32 = dma.hbm_to_vmem [thread:$0]  %s1, 6144, %s27, [#allocation6], 64, 64, 4
    $region9: #{tpu_custom_call.1} parent=1 // pred_fallthru
      _
    // Predicated region
    $region10: #{tpu_custom_call.1} parent=1 // pred_check
      _
    $region11: #{tpu_custom_call.1} parent=1 // pred_check_branch
      %34 = sbr.rel (0) target = $region13
    $region12: #{tpu_custom_call.1} parent=1 // pred_region
      _
    $region13: #{tpu_custom_call.1} parent=1 // pred_fallthru
      _
    // Predicated region
    $region14: #{tpu_custom_call.1} parent=1 // pred_check
      _
    $region15: #{tpu_custom_call.1} parent=1 // pred_check_branch
      %36 = sbr.rel (0) target = $region17
    $region16: #{tpu_custom_call.1} parent=1 // pred_region
      %37 = dma.done [#allocation3], 768
    $region17: #{tpu_custom_call.1} parent=1 // pred_fallthru
      _
    // Predicated region
    $region18: #{tpu_custom_call.1} parent=1 // pred_check
      _
    $region19: #{tpu_custom_call.1} parent=1 // pred_check_branch
      %39 = sbr.rel (0) target = $region21
    $region20: #{tpu_custom_call.1} parent=1 // pred_region
      %40 = dma.done [#allocation6], 6144
    $region21: #{tpu_custom_call.1} parent=1 // pred_fallthru
      _
    %v42 = vld [vmem:[#allocation2] sm:$0xff]
    %v43 = vld [vmem:[#allocation2 + $0x8] sm:$0xff]
    %v44 = vld [vmem:[#allocation2 + $0x10] sm:$0xff]
    %v45 = vld [vmem:[#allocation2 + $0x18] sm:$0xff]
    %v46 = vld [vmem:[#allocation2 + $0x20] sm:$0xff]
    %v47 = vld [vmem:[#allocation2 + $0x28] sm:$0xff]
    %v48 = vpack.c.bf16 %v42, %v42
    %v49 = vpack.c.bf16 %v43, %v43
    %v50 = vpack.c.bf16 %v44, %v44
    %v51 = vpack.c.bf16 %v45, %v45
    %v52 = vpack.c.bf16 %v46, %v46
    %v53 = vpack.c.bf16 %v47, %v47
    %v54 = vld [vmem:[#allocation5] sm:$0xf]
    %v55 = vld [vmem:[#allocation5 + $0x4] sm:$0xf]
    %v56 = vld [vmem:[#allocation5 + $0x8] sm:$0xf]
    %v57 = vld [vmem:[#allocation5 + $0xc] sm:$0xf]
    %v58 = vld [vmem:[#allocation5 + $0x10] sm:$0xf]
    %v59 = vld [vmem:[#allocation5 + $0x14] sm:$0xf]
    %v60 = vld [vmem:[#allocation5 + $0x18] sm:$0xf]
    %v61 = vld [vmem:[#allocation5 + $0x1c] sm:$0xf]
    %v62 = vld [vmem:[#allocation5 + $0x20] sm:$0xf]
    %v63 = vld [vmem:[#allocation5 + $0x24] sm:$0xf]
    %v64 = vld [vmem:[#allocation5 + $0x28] sm:$0xf]
    %v65 = vld [vmem:[#allocation5 + $0x2c] sm:$0xf]
    %v66 = vld [vmem:[#allocation5 + $0x30] sm:$0xf]
    %v67 = vld [vmem:[#allocation5 + $0x34] sm:$0xf]
    %v68 = vld [vmem:[#allocation5 + $0x38] sm:$0xf]
    %v69 = vld [vmem:[#allocation5 + $0x3c] sm:$0xf]
    %v70 = vld [vmem:[#allocation5 + $0x40] sm:$0xf]
    %v71 = vld [vmem:[#allocation5 + $0x44] sm:$0xf]
    %v72 = vld [vmem:[#allocation5 + $0x48] sm:$0xf]
    %v73 = vld [vmem:[#allocation5 + $0x4c] sm:$0xf]
    %v74 = vld [vmem:[#allocation5 + $0x50] sm:$0xf]
    %v75 = vld [vmem:[#allocation5 + $0x54] sm:$0xf]
    %v76 = vld [vmem:[#allocation5 + $0x58] sm:$0xf]
    %v77 = vld [vmem:[#allocation5 + $0x5c] sm:$0xf]
    %v78 = vld [vmem:[#allocation5 + $0x60] sm:$0xf]
    %v79 = vld [vmem:[#allocation5 + $0x64] sm:$0xf]
    %v80 = vld [vmem:[#allocation5 + $0x68] sm:$0xf]
    %v81 = vld [vmem:[#allocation5 + $0x6c] sm:$0xf]
    %v82 = vld [vmem:[#allocation5 + $0x70] sm:$0xf]
    %v83 = vld [vmem:[#allocation5 + $0x74] sm:$0xf]
    %v84 = vld [vmem:[#allocation5 + $0x78] sm:$0xf]
    %v85 = vld [vmem:[#allocation5 + $0x7c] sm:$0xf]
    %v86 = vld [vmem:[#allocation5 + $0x80] sm:$0xf]
    %v87 = vld [vmem:[#allocation5 + $0x84] sm:$0xf]
    %v88 = vld [vmem:[#allocation5 + $0x88] sm:$0xf]
    %v89 = vld [vmem:[#allocation5 + $0x8c] sm:$0xf]
    %v90 = vld [vmem:[#allocation5 + $0x90] sm:$0xf]
    %v91 = vld [vmem:[#allocation5 + $0x94] sm:$0xf]
    %v92 = vld [vmem:[#allocation5 + $0x98] sm:$0xf]
    %v93 = vld [vmem:[#allocation5 + $0x9c] sm:$0xf]
    %v94 = vld [vmem:[#allocation5 + $0xa0] sm:$0xf]
    %v95 = vld [vmem:[#allocation5 + $0xa4] sm:$0xf]
    %v96 = vld [vmem:[#allocation5 + $0xa8] sm:$0xf]
    %v97 = vld [vmem:[#allocation5 + $0xac] sm:$0xf]
    %v98 = vld [vmem:[#allocation5 + $0xb0] sm:$0xf]
    %v99 = vld [vmem:[#allocation5 + $0xb4] sm:$0xf]
    %v100 = vld [vmem:[#allocation5 + $0xb8] sm:$0xf]
    %v101 = vld [vmem:[#allocation5 + $0xbc] sm:$0xf]
    %v102 = vld [vmem:[#allocation5 + $0xc0] sm:$0xf]
    %v103 = vld [vmem:[#allocation5 + $0xc4] sm:$0xf]
    %v104 = vld [vmem:[#allocation5 + $0xc8] sm:$0xf]
    %v105 = vld [vmem:[#allocation5 + $0xcc] sm:$0xf]
    %v106 = vld [vmem:[#allocation5 + $0xd0] sm:$0xf]
    %v107 = vld [vmem:[#allocation5 + $0xd4] sm:$0xf]
    %v108 = vld [vmem:[#allocation5 + $0xd8] sm:$0xf]
    %v109 = vld [vmem:[#allocation5 + $0xdc] sm:$0xf]
    %v110 = vld [vmem:[#allocation5 + $0xe0] sm:$0xf]
    %v111 = vld [vmem:[#allocation5 + $0xe4] sm:$0xf]
    %v112 = vld [vmem:[#allocation5 + $0xe8] sm:$0xf]
    %v113 = vld [vmem:[#allocation5 + $0xec] sm:$0xf]
    %v114 = vld [vmem:[#allocation5 + $0xf0] sm:$0xf]
    %v115 = vld [vmem:[#allocation5 + $0xf4] sm:$0xf]
    %v116 = vld [vmem:[#allocation5 + $0xf8] sm:$0xf]
    %v117 = vld [vmem:[#allocation5 + $0xfc] sm:$0xf]
    %v118 = vld [vmem:[#allocation5 + $0x100] sm:$0xf]
    %v119 = vld [vmem:[#allocation5 + $0x104] sm:$0xf]
    %v120 = vld [vmem:[#allocation5 + $0x108] sm:$0xf]
    %v121 = vld [vmem:[#allocation5 + $0x10c] sm:$0xf]
    %v122 = vld [vmem:[#allocation5 + $0x110] sm:$0xf]
    %v123 = vld [vmem:[#allocation5 + $0x114] sm:$0xf]
    %v124 = vld [vmem:[#allocation5 + $0x118] sm:$0xf]
    %v125 = vld [vmem:[#allocation5 + $0x11c] sm:$0xf]
    %v126 = vld [vmem:[#allocation5 + $0x120] sm:$0xf]
    %v127 = vld [vmem:[#allocation5 + $0x124] sm:$0xf]
    %v128 = vld [vmem:[#allocation5 + $0x128] sm:$0xf]
    %v129 = vld [vmem:[#allocation5 + $0x12c] sm:$0xf]
    %v130 = vld [vmem:[#allocation5 + $0x130] sm:$0xf]
    %v131 = vld [vmem:[#allocation5 + $0x134] sm:$0xf]
    %v132 = vld [vmem:[#allocation5 + $0x138] sm:$0xf]
    %v133 = vld [vmem:[#allocation5 + $0x13c] sm:$0xf]
    %v134 = vld [vmem:[#allocation5 + $0x140] sm:$0xf]
    %v135 = vld [vmem:[#allocation5 + $0x144] sm:$0xf]
    %v136 = vld [vmem:[#allocation5 + $0x148] sm:$0xf]
    %v137 = vld [vmem:[#allocation5 + $0x14c] sm:$0xf]
    %v138 = vld [vmem:[#allocation5 + $0x150] sm:$0xf]
    %v139 = vld [vmem:[#allocation5 + $0x154] sm:$0xf]
    %v140 = vld [vmem:[#allocation5 + $0x158] sm:$0xf]
    %v141 = vld [vmem:[#allocation5 + $0x15c] sm:$0xf]
    %v142 = vld [vmem:[#allocation5 + $0x160] sm:$0xf]
    %v143 = vld [vmem:[#allocation5 + $0x164] sm:$0xf]
    %v144 = vld [vmem:[#allocation5 + $0x168] sm:$0xf]
    %v145 = vld [vmem:[#allocation5 + $0x16c] sm:$0xf]
    %v146 = vld [vmem:[#allocation5 + $0x170] sm:$0xf]
    %v147 = vld [vmem:[#allocation5 + $0x174] sm:$0xf]
    %v148 = vld [vmem:[#allocation5 + $0x178] sm:$0xf]
    %v149 = vld [vmem:[#allocation5 + $0x17c] sm:$0xf]
    %v150 = vld [vmem:[%s2] sm:$0x1]
    %v152 = vlaneseq
    %v153 = vshrl.u32 %v152, 7
    %v154 = vsub.s32 0, %v153
    %v155 = vrot.slane %v150, %v154
    %v253 = vunpack.c.l.b16 %v54
    %v254 = vunpack.c.l.b16 %v55
    %v255 = vunpack.c.l.b16 %v56
    %v256 = vunpack.c.l.b16 %v57
    %v257 = vunpack.c.l.b16 %v58
    %v258 = vunpack.c.l.b16 %v59
    %v259 = vunpack.c.l.b16 %v60
    %v260 = vunpack.c.l.b16 %v61
    %v261 = vunpack.c.l.b16 %v62
    %v262 = vunpack.c.l.b16 %v63
    %v263 = vunpack.c.l.b16 %v64
    %v264 = vunpack.c.l.b16 %v65
    %v265 = vunpack.c.l.b16 %v66
    %v266 = vunpack.c.l.b16 %v67
    %v267 = vunpack.c.l.b16 %v68
    %v268 = vunpack.c.l.b16 %v69
    %v269 = vunpack.c.l.b16 %v70
    %v270 = vunpack.c.l.b16 %v71
    %v271 = vunpack.c.l.b16 %v72
    %v272 = vunpack.c.l.b16 %v73
    %v273 = vunpack.c.l.b16 %v74
    %v274 = vunpack.c.l.b16 %v75
    %v275 = vunpack.c.l.b16 %v76
    %v276 = vunpack.c.l.b16 %v77
    %v277 = vunpack.c.l.b16 %v78
    %v278 = vunpack.c.l.b16 %v79
    %v279 = vunpack.c.l.b16 %v80
    %v280 = vunpack.c.l.b16 %v81
    %v281 = vunpack.c.l.b16 %v82
    %v282 = vunpack.c.l.b16 %v83
    %v283 = vunpack.c.l.b16 %v84
    %v284 = vunpack.c.l.b16 %v85
    %v285 = vunpack.c.l.b16 %v86
    %v286 = vunpack.c.l.b16 %v87
    %v287 = vunpack.c.l.b16 %v88
    %v288 = vunpack.c.l.b16 %v89
    %v289 = vunpack.c.l.b16 %v90
    %v290 = vunpack.c.l.b16 %v91
    %v291 = vunpack.c.l.b16 %v92
    %v292 = vunpack.c.l.b16 %v93
    %v293 = vunpack.c.l.b16 %v94
    %v294 = vunpack.c.l.b16 %v95
    %v295 = vunpack.c.l.b16 %v96
    %v296 = vunpack.c.l.b16 %v97
    %v297 = vunpack.c.l.b16 %v98
    %v298 = vunpack.c.l.b16 %v99
    %v299 = vunpack.c.l.b16 %v100
    %v300 = vunpack.c.l.b16 %v101
    %v301 = vunpack.c.l.b16 %v102
    %v302 = vunpack.c.l.b16 %v103
    %v303 = vunpack.c.l.b16 %v104
    %v304 = vunpack.c.l.b16 %v105
    %v305 = vunpack.c.l.b16 %v106
    %v306 = vunpack.c.l.b16 %v107
    %v307 = vunpack.c.l.b16 %v108
    %v308 = vunpack.c.l.b16 %v109
    %v309 = vunpack.c.l.b16 %v110
    %v310 = vunpack.c.l.b16 %v111
    %v311 = vunpack.c.l.b16 %v112
    %v312 = vunpack.c.l.b16 %v113
    %v313 = vunpack.c.l.b16 %v114
    %v314 = vunpack.c.l.b16 %v115
    %v315 = vunpack.c.l.b16 %v116
    %v316 = vunpack.c.l.b16 %v117
    %v317 = vunpack.c.l.b16 %v118
    %v318 = vunpack.c.l.b16 %v119
    %v319 = vunpack.c.l.b16 %v120
    %v320 = vunpack.c.l.b16 %v121
    %v321 = vunpack.c.l.b16 %v122
    %v322 = vunpack.c.l.b16 %v123
    %v323 = vunpack.c.l.b16 %v124
    %v324 = vunpack.c.l.b16 %v125
    %v325 = vunpack.c.l.b16 %v126
    %v326 = vunpack.c.l.b16 %v127
    %v327 = vunpack.c.l.b16 %v128
    %v328 = vunpack.c.l.b16 %v129
    %v329 = vunpack.c.l.b16 %v130
    %v330 = vunpack.c.l.b16 %v131
    %v331 = vunpack.c.l.b16 %v132
    %v332 = vunpack.c.l.b16 %v133
    %v333 = vunpack.c.l.b16 %v134
    %v334 = vunpack.c.l.b16 %v135
    %v335 = vunpack.c.l.b16 %v136
    %v336 = vunpack.c.l.b16 %v137
    %v337 = vunpack.c.l.b16 %v138
    %v338 = vunpack.c.l.b16 %v139
    %v339 = vunpack.c.l.b16 %v140
    %v340 = vunpack.c.l.b16 %v141
    %v341 = vunpack.c.l.b16 %v142
    %v342 = vunpack.c.l.b16 %v143
    %v343 = vunpack.c.l.b16 %v144
    %v344 = vunpack.c.l.b16 %v145
    %v345 = vunpack.c.l.b16 %v146
    %v346 = vunpack.c.l.b16 %v147
    %v347 = vunpack.c.l.b16 %v148
    %v348 = vunpack.c.l.b16 %v149
    %v349 = vpack.c.b16 %v254, %v253
    %v350 = vpack.c.b16 %v256, %v255
    %v351 = vpack.c.b16 %v258, %v257
    %v352 = vpack.c.b16 %v260, %v259
    %v353 = vpack.c.b16 %v262, %v261
    %v354 = vpack.c.b16 %v264, %v263
    %v355 = vpack.c.b16 %v266, %v265
    %v356 = vpack.c.b16 %v268, %v267
    %v357 = vpack.c.b16 %v270, %v269
    %v358 = vpack.c.b16 %v272, %v271
    %v359 = vpack.c.b16 %v274, %v273
    %v360 = vpack.c.b16 %v276, %v275
    %v361 = vpack.c.b16 %v278, %v277
    %v362 = vpack.c.b16 %v280, %v279
    %v363 = vpack.c.b16 %v282, %v281
    %v364 = vpack.c.b16 %v284, %v283
    %v365 = vpack.c.b16 %v286, %v285
    %v366 = vpack.c.b16 %v288, %v287
    %v367 = vpack.c.b16 %v290, %v289
    %v368 = vpack.c.b16 %v292, %v291
    %v369 = vpack.c.b16 %v294, %v293
    %v370 = vpack.c.b16 %v296, %v295
    %v371 = vpack.c.b16 %v298, %v297
    %v372 = vpack.c.b16 %v300, %v299
    %v373 = vpack.c.b16 %v302, %v301
    %v374 = vpack.c.b16 %v304, %v303
    %v375 = vpack.c.b16 %v306, %v305
    %v376 = vpack.c.b16 %v308, %v307
    %v377 = vpack.c.b16 %v310, %v309
    %v378 = vpack.c.b16 %v312, %v311
    %v379 = vpack.c.b16 %v314, %v313
    %v380 = vpack.c.b16 %v316, %v315
    %v381 = vpack.c.b16 %v318, %v317
    %v382 = vpack.c.b16 %v320, %v319
    %v383 = vpack.c.b16 %v322, %v321
    %v384 = vpack.c.b16 %v324, %v323
    %v385 = vpack.c.b16 %v326, %v325
    %v386 = vpack.c.b16 %v328, %v327
    %v387 = vpack.c.b16 %v330, %v329
    %v388 = vpack.c.b16 %v332, %v331
    %v389 = vpack.c.b16 %v334, %v333
    %v390 = vpack.c.b16 %v336, %v335
    %v391 = vpack.c.b16 %v338, %v337
    %v392 = vpack.c.b16 %v340, %v339
    %v393 = vpack.c.b16 %v342, %v341
    %v394 = vpack.c.b16 %v344, %v343
    %v395 = vpack.c.b16 %v346, %v345
    %v396 = vpack.c.b16 %v348, %v347
    %445 = vmatprep.subr.bf16.mxu0 0
    %446 = vmatpush1.bf16.msra.mxu0 %v356
    %447 = vmatprep.subr.bf16.mxu0 0
    %448 = vmatpush1.bf16.msra.mxu0 %v355
    %449 = vmatprep.subr.bf16.mxu0 0
    %450 = vmatpush1.bf16.msra.mxu0 %v354
    %451 = vmatprep.subr.bf16.mxu0 0
    %452 = vmatpush1.bf16.msra.mxu0 %v353
    %453 = vmatprep.subr.bf16.mxu0 0
    %454 = vmatpush1.bf16.msra.mxu0 %v352
    %455 = vmatprep.subr.bf16.mxu0 0
    %456 = vmatpush1.bf16.msra.mxu0 %v351
    %457 = vmatprep.subr.bf16.mxu0 0
    %458 = vmatpush1.bf16.msra.mxu0 %v350
    %459 = vmatprep.subr.bf16.mxu0 0
    %460 = vmatpush1.bf16.msra.mxu0 %v349
    %461 = vmatprep.subr.bf16.mxu0 0
    %462 = vmatpush2.bf16.msra.mxu0 %v364
    %463 = vmatprep.subr.bf16.mxu0 0
    %464 = vmatpush2.bf16.msra.mxu0 %v363
    %465 = vmatprep.subr.bf16.mxu0 0
    %466 = vmatpush2.bf16.msra.mxu0 %v362
    %467 = vmatprep.subr.bf16.mxu0 0
    %468 = vmatpush2.bf16.msra.mxu0 %v361
    %469 = vmatprep.subr.bf16.mxu0 0
    %470 = vmatpush2.bf16.msra.mxu0 %v360
    %471 = vmatprep.subr.bf16.mxu0 0
    %472 = vmatpush2.bf16.msra.mxu0 %v359
    %473 = vmatprep.subr.bf16.mxu0 0
    %474 = vmatpush2.bf16.msra.mxu0 %v358
    %475 = vmatprep.subr.bf16.mxu0 0
    %476 = vmatpush2.bf16.msra.mxu0 %v357
    %477 = vmatprep.mubr.bf16.mxu0 %v49
    %478 = vmatmul.mubr.bf16.gmra.mxu0 %v48
    %v479 = vpop.f32.mrf.mxu0
    %v480 = vadd.f32 %v155, %v479
    %v481 = vpop.f32.mrf.mxu0
    %v482 = vpop.f32.mrf.mxu0
    %v483 = vpop.f32.mrf.mxu0
    %484 = vdwg.mxu0
    %485 = vmatprep.subr.bf16.mxu0 0
    %486 = vmatpush1.bf16.msra.mxu0 %v372
    %487 = vmatprep.subr.bf16.mxu0 0
    %488 = vmatpush1.bf16.msra.mxu0 %v371
    %489 = vmatprep.subr.bf16.mxu0 0
    %490 = vmatpush1.bf16.msra.mxu0 %v370
    %491 = vmatprep.subr.bf16.mxu0 0
    %492 = vmatpush1.bf16.msra.mxu0 %v369
    %493 = vmatprep.subr.bf16.mxu0 0
    %494 = vmatpush1.bf16.msra.mxu0 %v368
    %495 = vmatprep.subr.bf16.mxu0 0
    %496 = vmatpush1.bf16.msra.mxu0 %v367
    %497 = vmatprep.subr.bf16.mxu0 0
    %498 = vmatpush1.bf16.msra.mxu0 %v366
    %499 = vmatprep.subr.bf16.mxu0 0
    %500 = vmatpush1.bf16.msra.mxu0 %v365
    %501 = vmatprep.subr.bf16.mxu0 0
    %502 = vmatpush2.bf16.msra.mxu0 %v380
    %503 = vmatprep.subr.bf16.mxu0 0
    %504 = vmatpush2.bf16.msra.mxu0 %v379
    %505 = vmatprep.subr.bf16.mxu0 0
    %506 = vmatpush2.bf16.msra.mxu0 %v378
    %507 = vmatprep.subr.bf16.mxu0 0
    %508 = vmatpush2.bf16.msra.mxu0 %v377
    %509 = vmatprep.subr.bf16.mxu0 0
    %510 = vmatpush2.bf16.msra.mxu0 %v376
    %511 = vmatprep.subr.bf16.mxu0 0
    %512 = vmatpush2.bf16.msra.mxu0 %v375
    %513 = vmatprep.subr.bf16.mxu0 0
    %514 = vmatpush2.bf16.msra.mxu0 %v374
    %515 = vmatprep.subr.bf16.mxu0 0
    %516 = vmatpush2.bf16.msra.mxu0 %v373
    %517 = vmatprep.mubr.bf16.mxu0 %v51
    %518 = vmatmul.mubr.bf16.gmra.mxu0 %v50
    %v519 = vpop.f32.mrf.mxu0
    %v520 = vadd.f32 %v480, %v519
    %v521 = vpop.f32.mrf.mxu0
    %v522 = vpop.f32.mrf.mxu0
    %v523 = vpop.f32.mrf.mxu0
    %524 = vdwg.mxu0
    %525 = vmatprep.subr.bf16.mxu0 0
    %526 = vmatpush1.bf16.msra.mxu0 %v388
    %527 = vmatprep.subr.bf16.mxu0 0
    %528 = vmatpush1.bf16.msra.mxu0 %v387
    %529 = vmatprep.subr.bf16.mxu0 0
    %530 = vmatpush1.bf16.msra.mxu0 %v386
    %531 = vmatprep.subr.bf16.mxu0 0
    %532 = vmatpush1.bf16.msra.mxu0 %v385
    %533 = vmatprep.subr.bf16.mxu0 0
    %534 = vmatpush1.bf16.msra.mxu0 %v384
    %535 = vmatprep.subr.bf16.mxu0 0
    %536 = vmatpush1.bf16.msra.mxu0 %v383
    %537 = vmatprep.subr.bf16.mxu0 0
    %538 = vmatpush1.bf16.msra.mxu0 %v382
    %539 = vmatprep.subr.bf16.mxu0 0
    %540 = vmatpush1.bf16.msra.mxu0 %v381
    %541 = vmatprep.subr.bf16.mxu0 0
    %542 = vmatpush2.bf16.msra.mxu0 %v396
    %543 = vmatprep.subr.bf16.mxu0 0
    %544 = vmatpush2.bf16.msra.mxu0 %v395
    %545 = vmatprep.subr.bf16.mxu0 0
    %546 = vmatpush2.bf16.msra.mxu0 %v394
    %547 = vmatprep.subr.bf16.mxu0 0
    %548 = vmatpush2.bf16.msra.mxu0 %v393
    %549 = vmatprep.subr.bf16.mxu0 0
    %550 = vmatpush2.bf16.msra.mxu0 %v392
    %551 = vmatprep.subr.bf16.mxu0 0
    %552 = vmatpush2.bf16.msra.mxu0 %v391
    %553 = vmatprep.subr.bf16.mxu0 0
    %554 = vmatpush2.bf16.msra.mxu0 %v390
    %555 = vmatprep.subr.bf16.mxu0 0
    %556 = vmatpush2.bf16.msra.mxu0 %v389
    %557 = vmatprep.mubr.bf16.mxu0 %v53
    %558 = vmatmul.mubr.bf16.gmra.mxu0 %v52
    %v559 = vpop.f32.mrf.mxu0
    %v560 = vadd.f32 %v520, %v559
    %v561 = vpop.f32.mrf.mxu0
    %v562 = vpop.f32.mrf.mxu0
    %v563 = vpop.f32.mrf.mxu0
    %564 = vdwg.mxu0
    %565 = vst [vmem:[#allocation7] sm:$0xff] %v560
    // Predicated region
    $region22: #{tpu_custom_call.1} parent=1 // pred_check
      _
    $region23: #{tpu_custom_call.1} parent=1 // pred_check_branch
      %567 = sbr.rel (0) target = $region25
    $region24: #{tpu_custom_call.1} parent=1 // pred_region
      %s569 = ssub.s32 128, 128
      %570 = vsyncadd [#allocation4], %s569
      %s572 = sshll.u32 [#allocation7], 4
      %s573 = int_to_ptr.vmem [resolvable:$true] %s572
      %575 = dma.vmem_to_hbm [thread:$0]  %s573, 128, %s3, [#allocation4]
    $region25: #{tpu_custom_call.1} parent=1 // pred_fallthru
      _
    // Predicated region
    $region26: #{tpu_custom_call.1} parent=1 // pred_check
      _
    $region27: #{tpu_custom_call.1} parent=1 // pred_check_branch
      %577 = sbr.rel (0) target = $region29
    $region28: #{tpu_custom_call.1} parent=1 // pred_region
      %578 = dma.done [#allocation4], 128
    $region29: #{tpu_custom_call.1} parent=1 // pred_fallthru
      _
    %579 = vsyncpa [#allocation3], 1
    %580 = vsyncpa [#allocation6], 1
    %581 = vsyncpa [#allocation4], 1

</llo_original>
